<compile_context>
chip_gen: v7x
topology: tpu7x:2x2x1
jax: 0.10.0
libtpu: 0.0.40
codegen_flags: <defaults>
</compile_context>

<pallas_src>
import functools

import jax
import jax.numpy as jnp
from jax.experimental import pallas as pl
from jax.experimental.pallas import tpu as pltpu

EPS = 1e-6


def _elu_plus_one(x):
    # elu(x) + 1 == x + 1 if x > 0 else exp(x)   (alpha = 1, PyTorch default).
    # exp(min(x, 0)) keeps the discarded branch finite.
    return jnp.where(x > 0, x + 1.0, jnp.exp(jnp.minimum(x, 0.0)))


def _device_defaults():
    """(lane packing target, VMEM capacity bytes) for the current TPU generation."""
    kind = ""
    try:
        kind = jax.devices()[0].device_kind.lower()
    except Exception:
        pass
    old_gen = any(t in kind for t in ("v2", "v3", "v4", "v5"))
    lane_target = 128 if old_gen else 256          # MXU width: 128 pre-v6, 256 on v6e/v7x
    vmem_bytes = None
    try:
        vmem_bytes = int(pltpu.get_tpu_info().vmem_capacity_bytes)
    except Exception:
        vmem_bytes = None
    if not vmem_bytes:
        vmem_bytes = (64 << 20) if ("v7" in kind or "7x" in kind) else (128 << 20)
    return lane_target, vmem_bytes


def _choose_head_group(H, D, Dv, lane_target):
    """Smallest head-group size G (divisor of H) that fills the MXU lane target."""
    if lane_target > 128:
        for g in range(1, H + 1):
            if H % g == 0 and g * D == lane_target and g * Dv <= lane_target \
               and (g * Dv) % 128 == 0:
                return g
    for g in range(1, H + 1):
        if H % g == 0 and (g * D) % 128 == 0 and (g * Dv) % 128 == 0:
            return g
    return H  # whole-H block: block width == full array dim, always layout-legal


def _choose_tile(n, cap):
    """Largest tile <= cap that divides n (multiple of 8), else the whole dim."""
    if n <= cap:
        return n
    cap = cap - cap % 8
    for t in range(cap, 7, -8):
        if n % t == 0:
            return t
    return n  # TODO(synk): prime/odd long sequences fall back to a whole-length block.


def _vmem_limit(tile_bytes, vmem_capacity):
    cap = int(vmem_capacity * 0.8)
    want = int(tile_bytes * 2) + (16 << 20)
    return max(min(want, cap), min(32 << 20, cap))


# ----------------------------------------------------------------------------
# Phase 1: accumulate KV = elu1(K)^T @ V and k_sum over S (K/V streamed once).
# ----------------------------------------------------------------------------
def _kv_build_kernel(p_ref, k_ref, v_ref, kv_ref, ksum_ref, kv_acc, ksum_acc,
                     *, mxu_dtype):
    # p_ref: (GD, GDv) block-diagonal 0/1 mask, f32
    # k_ref: (1, TS, GD)   v_ref: (1, TS, GDv)
    # kv_ref: (1, 1, GD, GDv) f32   ksum_ref: (1, 1, 1, GD) f32
    si = pl.program_id(2)
    ns = pl.num_programs(2)

    @pl.when(si == 0)
    def _init():
        kv_acc[...] = jnp.zeros_like(kv_acc)
        ksum_acc[...] = jnp.zeros_like(ksum_acc)

    k_feat = _elu_plus_one(k_ref[0].astype(jnp.float32))          # (TS, GD) f32
    v_blk = v_ref[0]                                              # (TS, GDv)

    # K^T @ V without materialising a transpose: contract dim 0 of both operands.
    kv_acc[...] += jax.lax.dot_general(
        k_feat.astype(mxu_dtype), v_blk.astype(mxu_dtype),
        dimension_numbers=(((0,), (0,)), ((), ())),
        preferred_element_type=jnp.float32)                       # (GD, GDv)
    ksum_acc[...] += jnp.sum(k_feat, axis=0, keepdims=True)       # (1, GD)

    @pl.when(si == ns - 1)
    def _finalize():
        # Zero the cross-head blocks of the packed KV once per (batch, group).
        kv_ref[0, 0] = kv_acc[...] * p_ref[...]
        ksum_ref[0, 0] = ksum_acc[...]


# ----------------------------------------------------------------------------
# Phase 2: out = (elu1(Q) @ KV_masked) / (elu1(Q) . k_sum per head + eps).
# ----------------------------------------------------------------------------
def _apply_kernel(p_ref, q_ref, kv_ref, ksum_ref, o_ref,
                  *, eps, mxu_dtype, approx_recip):
    # q_ref: (1, TL, GD)   kv_ref: (1, 1, GD, GDv) masked f32
    # ksum_ref: (1, 1, 1, GD) f32   p_ref: (GD, GDv) f32   o_ref: (1, TL, GDv)
    q_feat = _elu_plus_one(q_ref[0].astype(jnp.float32))          # (TL, GD) f32

    numer = jnp.dot(q_feat.astype(mxu_dtype), kv_ref[0, 0].astype(mxu_dtype),
                    preferred_element_type=jnp.float32)           # (TL, GDv)

    # Per-head denominator broadcast to each head's lanes via one fused
    # block-one-hot matmul (kept in f32; see precision note in the header).
    denom = jnp.dot(q_feat * ksum_ref[0, 0], p_ref[...],
                    preferred_element_type=jnp.float32) + eps     # (TL, GDv)
    z = pl.reciprocal(denom, approx=approx_recip)

    o_ref[0] = (numer * z).astype(o_ref.dtype)


def linear_attention(queries, keys, values, *, eps=EPS, mxu_dtype=None,
                     tile_l=2048, tile_s=2048, approx_recip=None):
    """queries: [N, L, H, D], keys: [N, S, H, D], values: [N, S, H, Dv]
    -> [N, L, H, Dv]."""
    N, L, H, D = queries.shape
    _, S, _, Dv = values.shape
    out_dtype = queries.dtype
    if mxu_dtype is None:
        # bf16 MXU operands (f32 accumulation) by default; f32 MXU runs far slower.
        mxu_dtype = jnp.bfloat16 if queries.dtype == jnp.float32 else queries.dtype
    if approx_recip is None:
        approx_recip = jnp.dtype(mxu_dtype) != jnp.dtype(jnp.float32)

    lane_target, vmem_bytes = _device_defaults()
    G = _choose_head_group(H, D, Dv, lane_target)
    nG = H // G
    GD, GDv = G * D, G * Dv

    # Guard the whole-H fallback: the packed KV block must stay small vs VMEM.
    if GD * GDv * 4 > vmem_bytes // 8:
        # TODO(synk): pad D/Dv to a 128-lane multiple instead of failing.
        raise ValueError(
            f"Packed head block {GD}x{GDv} f32 exceeds the VMEM scratch budget "
            f"({vmem_bytes // 8} bytes); pad head dims to a multiple of 128.")

    in_sz = jnp.dtype(queries.dtype).itemsize
    out_sz = jnp.dtype(out_dtype).itemsize

    # Generation-aware tile caps: keep double-buffered streaming tiles ~< VMEM/4.
    stream_budget = vmem_bytes // 4
    row_p1 = (GD + GDv) * in_sz               # one K row + one V row
    row_p2 = GD * in_sz + GDv * out_sz        # one Q row + one out row
    cap_s = max(64, min(tile_s, int(stream_budget // (2 * row_p1)) // 8 * 8))
    cap_l = max(64, min(tile_l, int(stream_budget // (2 * row_p2)) // 8 * 8))
    TS = _choose_tile(S, cap_s)
    TL = _choose_tile(L, cap_l)

    # Free reshapes (row-major contiguous): heads folded onto the lane axis.
    q2 = queries.reshape(N, L, H * D)
    k2 = keys.reshape(N, S, H * D)
    v2 = values.reshape(N, S, H * Dv)

    # Constant block-diagonal one-hot P[i, j] = (i // D == j // Dv), built once
    # on the host and DMA'd once per kernel (constant index_map).
    p_mask = (jnp.arange(GD)[:, None] // D == jnp.arange(GDv)[None, :] // Dv
              ).astype(jnp.float32)

    p1_bytes = (2 * TS * row_p1 + 2 * (GD * GDv * 4 + GD * 4)
                + GD * GDv * 4 + GD * 4 + GD * GDv * 4)
    p2_bytes = (2 * TL * row_p2 + 2 * (GD * GDv * 4 + GD * 4) + GD * GDv * 4)

    # ---- Phase 1: KV / k_sum build (K, V streamed exactly once) --------------
    kv, ksum = pl.pallas_call(
        functools.partial(_kv_build_kernel, mxu_dtype=mxu_dtype),
        out_shape=(
            jax.ShapeDtypeStruct((N, nG, GD, GDv), jnp.float32),
            jax.ShapeDtypeStruct((N, nG, 1, GD), jnp.float32),
        ),
        grid_spec=pltpu.PrefetchScalarGridSpec(
            num_scalar_prefetch=0,
            grid=(N, nG, S // TS),
            in_specs=[
                pl.BlockSpec((GD, GDv), lambda n, g, si: (0, 0)),
                pl.BlockSpec((1, TS, GD), lambda n, g, si: (n, si, g)),
                pl.BlockSpec((1, TS, GDv), lambda n, g, si: (n, si, g)),
            ],
            out_specs=[
                pl.BlockSpec((1, 1, GD, GDv), lambda n, g, si: (n, g, 0, 0)),
                pl.BlockSpec((1, 1, 1, GD), lambda n, g, si: (n, g, 0, 0)),
            ],
            scratch_shapes=[
                pltpu.VMEM((GD, GDv), jnp.float32),   # KV accumulator
                pltpu.VMEM((1, GD), jnp.float32),     # k_sum accumulator
            ],
        ),
        compiler_params=pltpu.CompilerParams(
            dimension_semantics=("parallel", "parallel", "arbitrary"),
            vmem_limit_bytes=_vmem_limit(p1_bytes, vmem_bytes),
        ),
    )(p_mask, k2, v2)

    # ---- Phase 2: apply Q over L (fully parallel grid) ------------------------
    out = pl.pallas_call(
        functools.partial(_apply_kernel, eps=eps, mxu_dtype=mxu_dtype,
                          approx_recip=approx_recip),
        out_shape=jax.ShapeDtypeStruct((N, L, H * Dv), out_dtype),
        grid_spec=pltpu.PrefetchScalarGridSpec(
            num_scalar_prefetch=0,
            grid=(N, nG, L // TL),
            in_specs=[
                pl.BlockSpec((GD, GDv), lambda n, g, li: (0, 0)),
                pl.BlockSpec((1, TL, GD), lambda n, g, li: (n, li, g)),
                pl.BlockSpec((1, 1, GD, GDv), lambda n, g, li: (n, g, 0, 0)),
                pl.BlockSpec((1, 1, 1, GD), lambda n, g, li: (n, g, 0, 0)),
            ],
            out_specs=pl.BlockSpec((1, TL, GDv), lambda n, g, li: (n, li, g)),
        ),
        compiler_params=pltpu.CompilerParams(
            dimension_semantics=("parallel", "parallel", "parallel"),
            vmem_limit_bytes=_vmem_limit(p2_bytes, vmem_bytes),
        ),
    )(p_mask, q2, kv, ksum)

    return out.reshape(N, L, H, Dv)


def _reference(queries, keys, values):
    """Pure-JAX reference mirroring the PyTorch forward exactly."""
    Q = jax.nn.elu(queries) + 1.0
    K = jax.nn.elu(keys) + 1.0
    v_length = values.shape[1]
    values = values / v_length
    KV = jnp.einsum('nshd,nshv->nhdv', K, values)
    Z = 1.0 / (jnp.einsum('nlhd,nhd->nlh', Q, K.sum(axis=1)) + EPS)
    return jnp.einsum('nlhd,nhdv,nlh->nlhv', Q, KV, Z) * v_length


if __name__ == "__main__":
    key = jax.random.PRNGKey(0)
    k1, k2, k3 = jax.random.split(key, 3)

    N, L, S, H, D = 2, 16, 8, 4, 32
    queries = jax.random.normal(k1, (N, L, H, D), dtype=jnp.float32)
    keys = jax.random.normal(k2, (N, S, H, D), dtype=jnp.float32)
    values = jax.random.normal(k3, (N, S, H, D), dtype=jnp.float32)

    ref = jax.block_until_ready(_reference(queries, keys, values))

    # Default fast path: bf16 MXU operands, f32 accumulation, EUP reciprocal.
    out = jax.block_until_ready(linear_attention(queries, keys, values))
    assert out.shape == (N, L, H, D), out.shape
    assert jnp.allclose(out, ref, atol=5e-2, rtol=5e-2), \
        float(jnp.max(jnp.abs(out - ref)))

    # Exact path: f32 matmul operands, exact reciprocal.
    out_f32 = jax.block_until_ready(
        linear_attention(queries, keys, values, mxu_dtype=jnp.float32))
    assert jnp.allclose(out_f32, ref, atol=1e-4, rtol=1e-4), \
        float(jnp.max(jnp.abs(out_f32 - ref)))

    print("KERNEL_OK")
</pallas_src>

<mosaic_0001>
module attributes {stable_mosaic.version = 11 : i64} {
  func.func @_kv_build_kernel(%arg0: i32, %arg1: i32, %arg2: i32, %arg3: memref<128x128xf32, #tpu.memory_space<vmem>>, %arg4: memref<1x8x128xf32, #tpu.memory_space<vmem>>, %arg5: memref<1x8x128xf32, #tpu.memory_space<vmem>>, %arg6: memref<1x1x128x128xf32, #tpu.memory_space<vmem>>, %arg7: memref<1x1x1x128xf32, #tpu.memory_space<vmem>>, %arg8: memref<128x128xf32, #tpu.memory_space<vmem>>, %arg9: memref<1x128xf32, #tpu.memory_space<vmem>>) attributes {dimension_semantics = [#tpu.dimension_semantics<parallel>, #tpu.dimension_semantics<parallel>, #tpu.dimension_semantics<arbitrary>], iteration_bounds = array<i64: 2, 1, 1>, scalar_prefetch = 0 : i64, scratch_operands = 2 : i64, tpu.core_type = #tpu.core_type<tc>, window_params = [{pipeline_mode = #tpu.pipeline_mode<synchronous>, transform_indices = @transform_0, window_bounds = array<i64: 128, 128>}, {transform_indices = @transform_1, window_bounds = array<i64: 1, 8, 128>}, {transform_indices = @transform_2, window_bounds = array<i64: 1, 8, 128>}, {transform_indices = @transform_3, window_bounds = array<i64: 1, 1, 128, 128>}, {transform_indices = @transform_4, window_bounds = array<i64: 1, 1, 1, 128>}]} {
    %c0_i32 = arith.constant 0 : i32
    %0 = arith.cmpi eq, %arg2, %c0_i32 : i32
    %1 = arith.extui %0 : i1 to i32
    %c0_i32_0 = arith.constant 0 : i32
    %2 = arith.cmpi ne, %1, %c0_i32_0 : i32
    scf.if %2 {
      %cst_20 = arith.constant 0.000000e+00 : f32
      %29 = vector.broadcast %cst_20 : f32 to vector<128x128xf32>
      %c0_21 = arith.constant 0 : index
      %c0_22 = arith.constant 0 : index
      %30 = vector.load %arg8[%c0_21, %c0_22] : memref<128x128xf32, #tpu.memory_space<vmem>>, vector<128x128xf32>
      tpu.vector_store %arg8[%c0_21, %c0_22], %29 {strides = array<i32>} : memref<128x128xf32, #tpu.memory_space<vmem>>, vector<128x128xf32>,
      %cst_23 = arith.constant 0.000000e+00 : f32
      %31 = vector.broadcast %cst_23 : f32 to vector<1x128xf32>
      %c0_24 = arith.constant 0 : index
      %c0_25 = arith.constant 0 : index
      %32 = vector.load %arg9[%c0_24, %c0_25] : memref<1x128xf32, #tpu.memory_space<vmem>>, vector<1x128xf32>
      tpu.vector_store %arg9[%c0_24, %c0_25], %31 {strides = array<i32>} : memref<1x128xf32, #tpu.memory_space<vmem>>, vector<1x128xf32>,
    } else {
    }
    %c0 = arith.constant 0 : index
    %c0_1 = arith.constant 0 : index
    %c0_2 = arith.constant 0 : index
    %3 = vector.load %arg4[%c0, %c0_1, %c0_2] : memref<1x8x128xf32, #tpu.memory_space<vmem>>, vector<1x8x128xf32>
    %4 = vector.shape_cast %3 : vector<1x8x128xf32> to vector<8x128xf32>
    %cst = arith.constant 0.000000e+00 : f32
    %5 = vector.broadcast %cst : f32 to vector<8x128xf32>
    %6 = arith.cmpf ogt, %4, %5 : vector<8x128xf32>
    %cst_3 = arith.constant 1.000000e+00 : f32
    %7 = vector.broadcast %cst_3 : f32 to vector<8x128xf32>
    %8 = arith.addf %4, %7 : vector<8x128xf32>
    %cst_4 = arith.constant 0.000000e+00 : f32
    %9 = vector.broadcast %cst_4 : f32 to vector<8x128xf32>
    %10 = arith.minimumf %4, %9 : vector<8x128xf32>
    %11 = math.exp %10 : vector<8x128xf32>
    %12 = arith.select %6, %8, %11 : vector<8x128xi1>, vector<8x128xf32>
    %c0_5 = arith.constant 0 : index
    %c0_6 = arith.constant 0 : index
    %c0_7 = arith.constant 0 : index
    %13 = vector.load %arg5[%c0_5, %c0_6, %c0_7] : memref<1x8x128xf32, #tpu.memory_space<vmem>>, vector<1x8x128xf32>
    %14 = vector.shape_cast %13 : vector<1x8x128xf32> to vector<8x128xf32>
    %c0_8 = arith.constant 0 : index
    %c0_9 = arith.constant 0 : index
    %15 = vector.load %arg8[%c0_8, %c0_9] : memref<128x128xf32, #tpu.memory_space<vmem>>, vector<128x128xf32>
    %16 = arith.truncf %12 : vector<8x128xf32> to vector<8x128xbf16>
    %17 = arith.truncf %14 : vector<8x128xf32> to vector<8x128xbf16>
    %cst_10 = arith.constant dense<0.000000e+00> : vector<128x128xf32>
    %18 = tpu.matmul %16, %17, %cst_10 {dimension_numbers = #tpu.dot_dimension_numbers<[0], [0], [1], [1], [0, 1, 1, 1], [], []>} : vector<8x128xbf16>, vector<8x128xbf16>, vector<128x128xf32> -> vector<128x128xf32>
    %19 = arith.addf %15, %18 : vector<128x128xf32>
    %c0_11 = arith.constant 0 : index
    %c0_12 = arith.constant 0 : index
    %20 = vector.load %arg8[%c0_11, %c0_12] : memref<128x128xf32, #tpu.memory_space<vmem>>, vector<128x128xf32>
    tpu.vector_store %arg8[%c0_11, %c0_12], %19 {strides = array<i32>} : memref<128x128xf32, #tpu.memory_space<vmem>>, vector<128x128xf32>,
    %c0_13 = arith.constant 0 : index
    %c0_14 = arith.constant 0 : index
    %21 = vector.load %arg9[%c0_13, %c0_14] : memref<1x128xf32, #tpu.memory_space<vmem>>, vector<1x128xf32>
    %cst_15 = arith.constant dense<0.000000e+00> : vector<128xf32>
    %22 = vector.multi_reduction <add>, %12, %cst_15 [0] : vector<8x128xf32> to vector<128xf32>
    %23 = vector.shape_cast %22 : vector<128xf32> to vector<1x128xf32>
    %24 = arith.addf %21, %23 : vector<1x128xf32>
    %c0_16 = arith.constant 0 : index
    %c0_17 = arith.constant 0 : index
    %25 = vector.load %arg9[%c0_16, %c0_17] : memref<1x128xf32, #tpu.memory_space<vmem>>, vector<1x128xf32>
    tpu.vector_store %arg9[%c0_16, %c0_17], %24 {strides = array<i32>} : memref<1x128xf32, #tpu.memory_space<vmem>>, vector<1x128xf32>,
    %c0_i32_18 = arith.constant 0 : i32
    %26 = arith.cmpi eq, %arg2, %c0_i32_18 : i32
    %27 = arith.extui %26 : i1 to i32
    %c0_i32_19 = arith.constant 0 : i32
    %28 = arith.cmpi ne, %27, %c0_i32_19 : i32
    scf.if %28 {
      %c0_20 = arith.constant 0 : index
      %c0_21 = arith.constant 0 : index
      %29 = vector.load %arg8[%c0_20, %c0_21] : memref<128x128xf32, #tpu.memory_space<vmem>>, vector<128x128xf32>
      %c0_22 = arith.constant 0 : index
      %c0_23 = arith.constant 0 : index
      %30 = vector.load %arg3[%c0_22, %c0_23] : memref<128x128xf32, #tpu.memory_space<vmem>>, vector<128x128xf32>
      %31 = arith.mulf %29, %30 : vector<128x128xf32>
      %c0_24 = arith.constant 0 : index
      %c0_25 = arith.constant 0 : index
      %c0_26 = arith.constant 0 : index
      %c0_27 = arith.constant 0 : index
      %32 = vector.load %arg6[%c0_24, %c0_25, %c0_26, %c0_27] : memref<1x1x128x128xf32, #tpu.memory_space<vmem>>, vector<1x1x128x128xf32>
      %33 = vector.shape_cast %32 : vector<1x1x128x128xf32> to vector<128x128xf32>
      %34 = vector.shape_cast %31 : vector<128x128xf32> to vector<1x1x128x128xf32>
      tpu.vector_store %arg6[%c0_24, %c0_25, %c0_26, %c0_27], %34 {strides = array<i32>} : memref<1x1x128x128xf32, #tpu.memory_space<vmem>>, vector<1x1x128x128xf32>,
      %c0_28 = arith.constant 0 : index
      %c0_29 = arith.constant 0 : index
      %35 = vector.load %arg9[%c0_28, %c0_29] : memref<1x128xf32, #tpu.memory_space<vmem>>, vector<1x128xf32>
      %c0_30 = arith.constant 0 : index
      %c0_31 = arith.constant 0 : index
      %c0_32 = arith.constant 0 : index
      %c0_33 = arith.constant 0 : index
      %36 = vector.load %arg7[%c0_30, %c0_31, %c0_32, %c0_33] : memref<1x1x1x128xf32, #tpu.memory_space<vmem>>, vector<1x1x1x128xf32>
      %37 = vector.shape_cast %36 : vector<1x1x1x128xf32> to vector<1x128xf32>
      %38 = vector.shape_cast %35 : vector<1x128xf32> to vector<1x1x1x128xf32>
      tpu.vector_store %arg7[%c0_30, %c0_31, %c0_32, %c0_33], %38 {strides = array<i32>} : memref<1x1x1x128xf32, #tpu.memory_space<vmem>>, vector<1x1x1x128xf32>,
    } else {
    }
    return
  }
  func.func @transform_0(%arg0: i32, %arg1: i32, %arg2: i32) -> (i32, i32) {
    %c0_i32 = arith.constant 0 : i32
    %c0_i32_0 = arith.constant 0 : i32
    %c0_i32_1 = arith.constant 0 : i32
    return %c0_i32, %c0_i32_0 : i32, i32
  }
  func.func @transform_1(%arg0: i32, %arg1: i32, %arg2: i32) -> (i32, i32, i32) {
    %c0_i32 = arith.constant 0 : i32
    return %arg0, %arg2, %arg1 : i32, i32, i32
  }
  func.func @transform_2(%arg0: i32, %arg1: i32, %arg2: i32) -> (i32, i32, i32) {
    %c0_i32 = arith.constant 0 : i32
    return %arg0, %arg2, %arg1 : i32, i32, i32
  }
  func.func @transform_3(%arg0: i32, %arg1: i32, %arg2: i32) -> (i32, i32, i32, i32) {
    %c0_i32 = arith.constant 0 : i32
    %c0_i32_0 = arith.constant 0 : i32
    %c0_i32_1 = arith.constant 0 : i32
    return %arg0, %arg1, %c0_i32, %c0_i32_0 : i32, i32, i32, i32
  }
  func.func @transform_4(%arg0: i32, %arg1: i32, %arg2: i32) -> (i32, i32, i32, i32) {
    %c0_i32 = arith.constant 0 : i32
    %c0_i32_0 = arith.constant 0 : i32
    %c0_i32_1 = arith.constant 0 : i32
    return %arg0, %arg1, %c0_i32, %c0_i32_0 : i32, i32, i32, i32
  }
}

</mosaic_0001>

<llo_original>
// kernel: tpu_custom_call.1
$region0: #{tpu_custom_call.1}
  #allocation0 [shape = 'u32[]', space=smem, size = 0x4, offset = 0x4, fixed_abs, tag = 'smem constant byte address 0x4 - core index']
  #allocation1 [shape = 'u32[144,128]{1,0:T(1,128)}', space=vmem, size = 0x12000, scoped, tag = 'internal scratch']
  #allocation2 [shape = 'f32[128,128]{1,0:T(8,128)}', space=vmem, size = 0x10000, scoped, tag = 'scratch operand']
  #allocation3 [shape = 'f32[1,128]{1,0:T(1,128)}', space=vmem, size = 0x200, scoped, tag = 'scratch operand']
  %s0 = inlined_call_operand.hbm [shape: f32[128,128], index: 0, kind: input, shape index: {}]
  %s1 = inlined_call_operand.hbm [shape: f32[2,8,128], index: 1, kind: input, shape index: {}]
  %s2 = inlined_call_operand.hbm [shape: f32[2,8,128], index: 2, kind: input, shape index: {}]
  %s3 = inlined_call_operand.hbm [shape: f32[2,1,128,128], index: 3, kind: output, shape index: {0}]
  %s4 = inlined_call_operand.hbm [shape: f32[2,1,1,128], index: 4, kind: output, shape index: {1}]
  %5 = xla_tuple %s3, %s4
  %s6 = sld [smem:[#allocation0]]
  $region73: #{tpu_custom_call.1} parent=0
    _
  %s8 = ssub.s32 1, %s6
  %s9 = scalar_select 0, %s8, %s6
  $region1: #{tpu_custom_call.1} parent=0
    #allocation4 [shape = 'u8[65536]{0}', space=vmem, size = 0x10000, scoped, tag = 'input window, operand 0, single buffered']
    #allocation5 [shape = 's32[2]{0}', space=sflag, size = 0x8, scoped, tag = 'scoped memory for tpu_custom_call.1']
    #allocation6 [shape = 's32[2]{0}', space=sflag, size = 0x8, scoped, tag = 'scoped memory for tpu_custom_call.1']
    #allocation7 [shape = 'u8[8192]{0}', space=vmem, size = 0x2000, scoped, tag = 'input window, operand 1']
    #allocation8 [shape = 's32[2]{0}', space=sflag, size = 0x8, scoped, tag = 'scoped memory for tpu_custom_call.1']
    #allocation9 [shape = 'u8[8192]{0}', space=vmem, size = 0x2000, scoped, tag = 'input window, operand 2']
    #allocation10 [shape = 'u8[131072]{0}', space=vmem, size = 0x20000, scoped, tag = 'output window, operand 0']
    #allocation11 [shape = 'u8[1024]{0}', space=vmem, size = 0x400, scoped, tag = 'output window, operand 1']
    #allocation12 [shape = 's32[2]{0}', space=sflag, size = 0x8, scoped, tag = 'scoped memory for tpu_custom_call.1']
    %10 = vsyncpa [#allocation5], 0
    %11 = vsyncpa [#allocation8], 0
    %s12 = scalar_lea.sflag [#allocation8], 1
    %13 = vsyncpa %s12, 0
    %14 = vsyncpa [#allocation6], 0
    %s15 = scalar_lea.sflag [#allocation6], 1
    %16 = vsyncpa %s15, 0
    %17 = vsyncpa [#allocation12], 0
    %s18 = scalar_lea.sflag [#allocation12], 1
    %19 = vsyncpa %s18, 0
    loop: start=0, step=1, limit=4
    $region2: #{tpu_custom_call.1} parent=1 // loop_pre_header
      _
    $region3: #{tpu_custom_call.1} parent=1 // loop_header
      %s21 = sphi 0, %s25
      %p22 = scmp.ge.s32.totalorder %s21, 4
      %s28 = sphi 0, %s47
      %s29 = sphi 0, %s43
      %s30 = sphi 0, %s39
      %s31 = sphi 0, %s28
      %s32 = sphi 0, %s29
      %s33 = sphi 0, %s30
      %s34 = sphi 0, %s31
      %s35 = sphi 0, %s32
      %s36 = sphi 0, %s33
      %s48 = sphi 0, %s48
      %s50 = sphi 0, %s48
      %s51 = sphi 0, %s50
      %s65 = sphi 0, %s51
      %s75 = sphi 0, %s77
      %s78 = sphi 0, %s75
      %s79 = sphi 0, %s78
      %s95 = sphi 0, %s79
      %s105 = sphi 0, %s107
      %s108 = sphi 0, %s105
      %s109 = sphi 0, %s108
      %s125 = sphi 0, %s109
      %s133 = sphi 0, %s135
      %s136 = sphi 0, %s133
      %s137 = sphi 0, %s136
      %s153 = sphi 0, %s137
      %s161 = sphi 0, %s163
      %s164 = sphi 0, %s161
      %s165 = sphi 0, %s164
      %s181 = sphi 0, %s165
    $region4: #{tpu_custom_call.1} parent=1 // loop_header_branch
      %24 = sbr.rel (%p22) target = $region8
    $region5: #{tpu_custom_call.1} parent=1 // loop_body
      %s26 = ssub.s32 %s21, 1
      %s27 = ssub.s32 %s21, 2
      %s37 = sadd.s32 1, %s30
      %p38 = scmp.ge.s32.totalorder %s37, 1
      %s39 = scalar_select %p38, 0, %s37
      %s40 = sadd.s32 1, %s29
      %s41 = scalar_select %p38, %s40, %s29
      %p42 = scmp.ge.s32.totalorder %s41, 1
      %s43 = scalar_select %p42, 0, %s41
      %s44 = sadd.s32 1, %s28
      %s45 = scalar_select %p42, %s44, %s28
      %p46 = scmp.ge.s32.totalorder %s45, 2
      %s47 = scalar_select %p46, 0, %s45
      %s49 = sadd.s32 %s48, 1
      %p52 = scmp.eq.s32.totalorder %s21, 1
      %p53 = scmp.ne.s32.totalorder %s48, %s50
      %p54 = scmp.eq.s32.totalorder %s21, 0
      %p55 = por %p53, %p54
      %p56 = scmp.ne.s32.totalorder %s48, %s50
      %p57 = scmp.eq.s32.totalorder %s26, 1
      %p58 = por %p56, %p57
      %p59 = scmp.ne.s32.totalorder %s50, %s51
      %p60 = scmp.eq.s32.totalorder %s26, 0
      %p61 = por %p59, %p60
      %p62 = scmp.ne.s32.totalorder %s50, %s51
      %p63 = scmp.eq.s32.totalorder %s27, 1
      %p64 = por %p62, %p63
      %p66 = scmp.ne.s32.totalorder %s51, %s65
      %p67 = scmp.eq.s32.totalorder %s27, 0
      %p68 = por %p66, %p67
      %s69 = ssub.s32 %s28, %s47
      %s70 = ssub.s32 %s30, %s39
      %s71 = sor.u32 %s69, %s70
      %s72 = ssub.s32 %s29, %s43
      %s73 = sor.u32 %s71, %s72
      %p74 = scmp.eq.s32.totalorder %s73, 0
      %s76 = sadd.s32 %s75, 1
      %s77 = scalar_select %p74, %s75, %s76
      %p80 = pneg %p74
      %p81 = scmp.eq.s32.totalorder %s21, 1
      %p82 = por %p80, %p81
      %p83 = scmp.ne.s32.totalorder %s75, %s78
      %p84 = scmp.eq.s32.totalorder %s21, 0
      %p85 = por %p83, %p84
      %p86 = scmp.ne.s32.totalorder %s75, %s78
      %p87 = scmp.eq.s32.totalorder %s26, 1
      %p88 = por %p86, %p87
      %p89 = scmp.ne.s32.totalorder %s78, %s79
      %p90 = scmp.eq.s32.totalorder %s26, 0
      %p91 = por %p89, %p90
      %p92 = scmp.ne.s32.totalorder %s78, %s79
      %p93 = scmp.eq.s32.totalorder %s27, 1
      %p94 = por %p92, %p93
      %p96 = scmp.ne.s32.totalorder %s79, %s95
      %p97 = scmp.eq.s32.totalorder %s27, 0
      %p98 = por %p96, %p97
      %s99 = ssub.s32 %s28, %s47
      %s100 = ssub.s32 %s30, %s39
      %s101 = sor.u32 %s99, %s100
      %s102 = ssub.s32 %s29, %s43
      %s103 = sor.u32 %s101, %s102
      %p104 = scmp.eq.s32.totalorder %s103, 0
      %s106 = sadd.s32 %s105, 1
      %s107 = scalar_select %p104, %s105, %s106
      %p110 = pneg %p104
      %p111 = scmp.eq.s32.totalorder %s21, 1
      %p112 = por %p110, %p111
      %p113 = scmp.ne.s32.totalorder %s105, %s108
      %p114 = scmp.eq.s32.totalorder %s21, 0
      %p115 = por %p113, %p114
      %p116 = scmp.ne.s32.totalorder %s105, %s108
      %p117 = scmp.eq.s32.totalorder %s26, 1
      %p118 = por %p116, %p117
      %p119 = scmp.ne.s32.totalorder %s108, %s109
      %p120 = scmp.eq.s32.totalorder %s26, 0
      %p121 = por %p119, %p120
      %p122 = scmp.ne.s32.totalorder %s108, %s109
      %p123 = scmp.eq.s32.totalorder %s27, 1
      %p124 = por %p122, %p123
      %p126 = scmp.ne.s32.totalorder %s109, %s125
      %p127 = scmp.eq.s32.totalorder %s27, 0
      %p128 = por %p126, %p127
      %s129 = ssub.s32 %s28, %s47
      %s130 = ssub.s32 %s29, %s43
      %s131 = sor.u32 %s129, %s130
      %p132 = scmp.eq.s32.totalorder %s131, 0
      %s134 = sadd.s32 %s133, 1
      %s135 = scalar_select %p132, %s133, %s134
      %p138 = pneg %p132
      %p139 = scmp.eq.s32.totalorder %s21, 1
      %p140 = por %p138, %p139
      %p141 = scmp.ne.s32.totalorder %s133, %s136
      %p142 = scmp.eq.s32.totalorder %s21, 0
      %p143 = por %p141, %p142
      %p144 = scmp.ne.s32.totalorder %s133, %s136
      %p145 = scmp.eq.s32.totalorder %s26, 1
      %p146 = por %p144, %p145
      %p147 = scmp.ne.s32.totalorder %s136, %s137
      %p148 = scmp.eq.s32.totalorder %s26, 0
      %p149 = por %p147, %p148
      %p150 = scmp.ne.s32.totalorder %s136, %s137
      %p151 = scmp.eq.s32.totalorder %s27, 1
      %p152 = por %p150, %p151
      %p154 = scmp.ne.s32.totalorder %s137, %s153
      %p155 = scmp.eq.s32.totalorder %s27, 0
      %p156 = por %p154, %p155
      %s157 = ssub.s32 %s28, %s47
      %s158 = ssub.s32 %s29, %s43
      %s159 = sor.u32 %s157, %s158
      %p160 = scmp.eq.s32.totalorder %s159, 0
      %s162 = sadd.s32 %s161, 1
      %s163 = scalar_select %p160, %s161, %s162
      %p166 = pneg %p160
      %p167 = scmp.eq.s32.totalorder %s21, 1
      %p168 = por %p166, %p167
      %p169 = scmp.ne.s32.totalorder %s161, %s164
      %p170 = scmp.eq.s32.totalorder %s21, 0
      %p171 = por %p169, %p170
      %p172 = scmp.ne.s32.totalorder %s161, %s164
      %p173 = scmp.eq.s32.totalorder %s26, 1
      %p174 = por %p172, %p173
      %p175 = scmp.ne.s32.totalorder %s164, %s165
      %p176 = scmp.eq.s32.totalorder %s26, 0
      %p177 = por %p175, %p176
      %p178 = scmp.ne.s32.totalorder %s164, %s165
      %p179 = scmp.eq.s32.totalorder %s27, 1
      %p180 = por %p178, %p179
      %p182 = scmp.ne.s32.totalorder %s165, %s181
      %p183 = scmp.eq.s32.totalorder %s27, 0
      %p184 = por %p182, %p183
      %p185 = scmp.le.s32.totalorder 1, %s21
      %p186 = scmp.lt.s32.totalorder %s21, 3
      %p187 = pnand %p185, %p186
      %p188 = pneg %p187
      // Predicated region
      $region9: #{tpu_custom_call.1} parent=5 // pred_check
        _
      $region10: #{tpu_custom_call.1} parent=5 // pred_check_branch
        %190 = sbr.rel (%p187) target = $region12
      $region11: #{tpu_custom_call.1} parent=5 // pred_region
        %s191 = ssub.s32 %s21, 1
        // Predicated region
        $region13: #{tpu_custom_call.1} parent=11 // pred_check
          %p192 = pneg %p61
        $region14: #{tpu_custom_call.1} parent=11 // pred_check_branch
          %194 = sbr.rel (%p192) target = $region16
        $region15: #{tpu_custom_call.1} parent=11 // pred_region
          %s196 = ssub.s32 2048, 2048
          %197 = vsyncadd [#allocation5], %s196
          %s198 = sshll.u32 [#allocation4], 4
          %s199 = int_to_ptr.vmem [resolvable:$true] %s198
          %204 = dma.hbm_to_vmem [thread:$0]  %s0, 2048, %s199, [#allocation5], 128, 128, 8
        $region16: #{tpu_custom_call.1} parent=11 // pred_fallthru
          _
      $region12: #{tpu_custom_call.1} parent=5 // pred_fallthru
        _
      %p205 = scmp.lt.s32.totalorder %s21, 2
      // Predicated region
      $region17: #{tpu_custom_call.1} parent=5 // pred_check
        %p206 = pneg %p205
      $region18: #{tpu_custom_call.1} parent=5 // pred_check_branch
        %208 = sbr.rel (%p206) target = $region20
      $region19: #{tpu_custom_call.1} parent=5 // pred_region
        // Predicated region
        $region21: #{tpu_custom_call.1} parent=19 // pred_check
          %p209 = pneg %p85
        $region22: #{tpu_custom_call.1} parent=19 // pred_check_branch
          %211 = sbr.rel (%p209) target = $region24
        $region23: #{tpu_custom_call.1} parent=19 // pred_region
          %s212 = sand.u32 %s21, 1
          %s213 = scalar_lea.sflag [#allocation8], %s212
          %s214 = sand.u32 %s75, 1
          %s215 = smul.addr %s214, 8
          %s216 = scalar_lea.vmem [#allocation7], %s215
          %s218 = ssub.s32 128, 128
          %219 = vsyncadd %s213, %s218
          %s220 = sadd.s32 %s29, %s30
          %s221 = sadd.s32 %s220, %s28
          %s222 = smul.addr %s221, 128
          %s223 = scalar_lea.hbm %s1, %s222
          %s225 = sshll.u32 %s216, 4
          %s226 = int_to_ptr.vmem [resolvable:$true] %s225
          %228 = dma.hbm_to_vmem [thread:$0]  %s223, 128, %s226, %s213
        $region24: #{tpu_custom_call.1} parent=19 // pred_fallthru
          _
        // Predicated region
        $region25: #{tpu_custom_call.1} parent=19 // pred_check
          %p229 = pneg %p115
        $region26: #{tpu_custom_call.1} parent=19 // pred_check_branch
          %231 = sbr.rel (%p229) target = $region28
        $region27: #{tpu_custom_call.1} parent=19 // pred_region
          %s232 = sand.u32 %s21, 1
          %s233 = scalar_lea.sflag [#allocation8], %s232
          %s234 = sand.u32 %s105, 1
          %s235 = smul.addr %s234, 8
          %s236 = scalar_lea.vmem [#allocation9], %s235
          %s238 = ssub.s32 128, 128
          %239 = vsyncadd %s233, %s238
          %s240 = sadd.s32 %s29, %s30
          %s241 = sadd.s32 %s240, %s28
          %s242 = smul.addr %s241, 128
          %s243 = scalar_lea.hbm %s2, %s242
          %s245 = sshll.u32 %s236, 4
          %s246 = int_to_ptr.vmem [resolvable:$true] %s245
          %248 = dma.hbm_to_vmem [thread:$0]  %s243, 128, %s246, %s233
        $region28: #{tpu_custom_call.1} parent=19 // pred_fallthru
          _
      $region20: #{tpu_custom_call.1} parent=5 // pred_fallthru
        _
      %p249 = scmp.le.s32.totalorder 1, %s21
      %p250 = scmp.lt.s32.totalorder %s21, 3
      %p251 = pnand %p249, %p250
      %p252 = pneg %p251
      // Predicated region
      $region29: #{tpu_custom_call.1} parent=5 // pred_check
        _
      $region30: #{tpu_custom_call.1} parent=5 // pred_check_branch
        %254 = sbr.rel (%p251) target = $region32
      $region31: #{tpu_custom_call.1} parent=5 // pred_region
        %s255 = ssub.s32 %s21, 1
        // Predicated region
        $region33: #{tpu_custom_call.1} parent=31 // pred_check
          %p256 = pneg %p61
        $region34: #{tpu_custom_call.1} parent=31 // pred_check_branch
          %258 = sbr.rel (%p256) target = $region36
        $region35: #{tpu_custom_call.1} parent=31 // pred_region
          %259 = dma.done [#allocation5], 2048
        $region36: #{tpu_custom_call.1} parent=31 // pred_fallthru
          _
        %s260 = sand.u32 %s26, 1
        %s261 = scalar_lea.sflag [#allocation8], %s260
        %s262 = sand.u32 %s78, 1
        %s263 = smul.addr %s262, 8
        %s264 = scalar_lea.vmem [#allocation7], %s263
        // Predicated region
        $region37: #{tpu_custom_call.1} parent=31 // pred_check
          %p265 = pneg %p91
        $region38: #{tpu_custom_call.1} parent=31 // pred_check_branch
          %267 = sbr.rel (%p265) target = $region40
        $region39: #{tpu_custom_call.1} parent=31 // pred_region
          %268 = dma.done %s261, 128
        $region40: #{tpu_custom_call.1} parent=31 // pred_fallthru
          _
        %s269 = sand.u32 %s26, 1
        %s270 = scalar_lea.sflag [#allocation8], %s269
        %s271 = sand.u32 %s108, 1
        %s272 = smul.addr %s271, 8
        %s273 = scalar_lea.vmem [#allocation9], %s272
        // Predicated region
        $region41: #{tpu_custom_call.1} parent=31 // pred_check
          %p274 = pneg %p121
        $region42: #{tpu_custom_call.1} parent=31 // pred_check_branch
          %276 = sbr.rel (%p274) target = $region44
        $region43: #{tpu_custom_call.1} parent=31 // pred_region
          %277 = dma.done %s270, 128
        $region44: #{tpu_custom_call.1} parent=31 // pred_fallthru
          _
        %p278 = pneg %p61
        %p279 = pneg %p58
        %s280 = sand.u32 %s26, 1
        %s281 = scalar_lea.sflag [#allocation8], %s280
        %s282 = sand.u32 %s78, 1
        %s283 = smul.addr %s282, 8
        %s284 = scalar_lea.vmem [#allocation7], %s283
        %p285 = pneg %p91
        %p286 = pneg %p88
        %s287 = sand.u32 %s26, 1
        %s288 = scalar_lea.sflag [#allocation8], %s287
        %s289 = sand.u32 %s108, 1
        %s290 = smul.addr %s289, 8
        %s291 = scalar_lea.vmem [#allocation9], %s290
        %p292 = pneg %p121
        %p293 = pneg %p118
        %p294 = pneg %p149
        %p295 = pneg %p146
        %s296 = sand.u32 %s136, 1
        %s297 = scalar_lea.sflag [#allocation6], %s296
        %s298 = sand.u32 %s136, 1
        %s299 = smul.addr %s298, 128
        %s300 = scalar_lea.vmem [#allocation10], %s299
        %p301 = pneg %p177
        %p302 = pneg %p174
        %s303 = sand.u32 %s164, 1
        %s304 = scalar_lea.sflag [#allocation12], %s303
        %s305 = sand.u32 %s164, 1
        %s306 = scalar_lea.vmem [#allocation11], %s305
        %p308 = scmp.eq.s32.totalorder %s33, 0
        // Predicated region
        $region45: #{tpu_custom_call.1} parent=31 // pred_check
          %p309 = pneg %p308
        $region46: #{tpu_custom_call.1} parent=31 // pred_check_branch
          %311 = sbr.rel (%p309) target = $region48
        $region47: #{tpu_custom_call.1} parent=31 // pred_region
          %312 = vst [vmem:[#allocation2] sm:$0xff] 0.0
          %313 = vst [vmem:[#allocation2 + $0x8] sm:$0xff] 0.0
          %314 = vst [vmem:[#allocation2 + $0x10] sm:$0xff] 0.0
          %315 = vst [vmem:[#allocation2 + $0x18] sm:$0xff] 0.0
          %316 = vst [vmem:[#allocation2 + $0x20] sm:$0xff] 0.0
          %317 = vst [vmem:[#allocation2 + $0x28] sm:$0xff] 0.0
          %318 = vst [vmem:[#allocation2 + $0x30] sm:$0xff] 0.0
          %319 = vst [vmem:[#allocation2 + $0x38] sm:$0xff] 0.0
          %320 = vst [vmem:[#allocation2 + $0x40] sm:$0xff] 0.0
          %321 = vst [vmem:[#allocation2 + $0x48] sm:$0xff] 0.0
          %322 = vst [vmem:[#allocation2 + $0x50] sm:$0xff] 0.0
          %323 = vst [vmem:[#allocation2 + $0x58] sm:$0xff] 0.0
          %324 = vst [vmem:[#allocation2 + $0x60] sm:$0xff] 0.0
          %325 = vst [vmem:[#allocation2 + $0x68] sm:$0xff] 0.0
          %326 = vst [vmem:[#allocation2 + $0x70] sm:$0xff] 0.0
          %327 = vst [vmem:[#allocation2 + $0x78] sm:$0xff] 0.0
          %328 = vst [vmem:[#allocation3] sm:$0x1] 0.0
        $region48: #{tpu_custom_call.1} parent=31 // pred_fallthru
          _
        %v329 = vld [vmem:[%s264] sm:$0xff]
        %vm330 = vcmp.gt.f32.partialorder %v329, 0.0
        %v331 = vadd.f32 %v329, 1.0
        %v332 = vmin.f32 %v329, 0.0
        %v333 = vmul.f32 %v332, 1.442695
        %v334 = vpow.pop %v333
        %v335 = vsel %vm330, %v331, %v334
        %v336 = vld [vmem:[%s273] sm:$0xff]
        %v337 = vld [vmem:[#allocation2] sm:$0xff]
        %v338 = vld [vmem:[#allocation2 + $0x8] sm:$0xff]
        %v339 = vld [vmem:[#allocation2 + $0x10] sm:$0xff]
        %v340 = vld [vmem:[#allocation2 + $0x18] sm:$0xff]
        %v341 = vld [vmem:[#allocation2 + $0x20] sm:$0xff]
        %v342 = vld [vmem:[#allocation2 + $0x28] sm:$0xff]
        %v343 = vld [vmem:[#allocation2 + $0x30] sm:$0xff]
        %v344 = vld [vmem:[#allocation2 + $0x38] sm:$0xff]
        %v345 = vld [vmem:[#allocation2 + $0x40] sm:$0xff]
        %v346 = vld [vmem:[#allocation2 + $0x48] sm:$0xff]
        %v347 = vld [vmem:[#allocation2 + $0x50] sm:$0xff]
        %v348 = vld [vmem:[#allocation2 + $0x58] sm:$0xff]
        %v349 = vld [vmem:[#allocation2 + $0x60] sm:$0xff]
        %v350 = vld [vmem:[#allocation2 + $0x68] sm:$0xff]
        %v351 = vld [vmem:[#allocation2 + $0x70] sm:$0xff]
        %v352 = vld [vmem:[#allocation2 + $0x78] sm:$0xff]
        %v353 = vpack.c.bf16 %v335, %v335
        %v354 = vpack.c.bf16 %v336, %v336
        %355 = vxpose.xlu0.c.b16.start [1/8] %v353, 128
        %356 = vxpose.xlu0.c.b16.cont [2/8] 0, 128
        %357 = vxpose.xlu0.c.b16.cont [3/8] 0, 128
        %358 = vxpose.xlu0.c.b16.cont [4/8] 0, 128
        %359 = vxpose.xlu0.c.b16.cont [5/8] 0, 128
        %360 = vxpose.xlu0.c.b16.cont [6/8] 0, 128
        %361 = vxpose.xlu0.c.b16.cont [7/8] 0, 128
        %362 = vxpose.xlu0.c.b16.end [8/8] 0, 128
        %v363 = vpop.trf.xlu0
        %v364 = vpop.trf.xlu0
        %v365 = vpop.trf.xlu0
        %v366 = vpop.trf.xlu0
        %v367 = vpop.trf.xlu0
        %v368 = vpop.trf.xlu0
        %v369 = vpop.trf.xlu0
        %v370 = vpop.trf.xlu0
        %vm371 = vcmask 64512
        %v373 = vsel %vm371, %v363, 0
        %v376 = vsel %vm371, %v364, 0
        %v379 = vsel %vm371, %v365, 0
        %v382 = vsel %vm371, %v366, 0
        %v385 = vsel %vm371, %v367, 0
        %v388 = vsel %vm371, %v368, 0
        %v391 = vsel %vm371, %v369, 0
        %v394 = vsel %vm371, %v370, 0
        %vm396 = vcmask 1043456
        %v398 = vsel %vm396, %v354, 0
        %400 = vmatprep.subr.bf16.mxu0 0
        %401 = vmatpush1.bf16.msra.mxu0 %v398
        %402 = vmatprep.subr.bf16.mxu0 0
        %403 = vmatpush1.bf16.msra.mxu0 0
        %404 = vmatprep.subr.bf16.mxu0 0
        %405 = vmatpush1.bf16.msra.mxu0 0
        %406 = vmatprep.subr.bf16.mxu0 0
        %407 = vmatpush1.bf16.msra.mxu0 0
        %408 = vmatprep.subr.bf16.mxu0 0
        %409 = vmatpush1.bf16.msra.mxu0 0
        %410 = vmatprep.subr.bf16.mxu0 0
        %411 = vmatpush1.bf16.msra.mxu0 0
        %412 = vmatprep.subr.bf16.mxu0 0
        %413 = vmatpush1.bf16.msra.mxu0 0
        %414 = vmatprep.subr.bf16.mxu0 0
        %415 = vmatpush1.bf16.msra.mxu0 0
        %416 = vmatprep.subr.bf16.mxu0 0
        %417 = vmatpush1.bf16.msra.mxu0 0
        %418 = vmatprep.subr.bf16.mxu0 0
        %419 = vmatpush1.bf16.msra.mxu0 0
        %420 = vmatprep.subr.bf16.mxu0 0
        %421 = vmatpush1.bf16.msra.mxu0 0
        %422 = vmatprep.subr.bf16.mxu0 0
        %423 = vmatpush1.bf16.msra.mxu0 0
        %424 = vmatprep.subr.bf16.mxu0 0
        %425 = vmatpush1.bf16.msra.mxu0 0
        %426 = vmatprep.subr.bf16.mxu0 0
        %427 = vmatpush1.bf16.msra.mxu0 0
        %428 = vmatprep.subr.bf16.mxu0 0
        %429 = vmatpush1.bf16.msra.mxu0 0
        %430 = vmatprep.subr.bf16.mxu0 0
        %431 = vmatpush1.bf16.msra.mxu0 0
        %432 = vmatprep.mubr.bf16.mxu0 0
        %433 = vmatmul.mubr.bf16.gmra.mrb[0].mxu0 %v373
        %v434 = vpop.f32.mrb[0].mxu0
        %v435 = vadd.f32 0.0, %v434
        %v436 = vpop.f32.mrb[0].mxu0
        %v437 = vpop.f32.mrb[0].mxu0
        %v438 = vadd.f32 0.0, %v437
        %v439 = vpop.f32.mrb[0].mxu0
        %440 = vmatprep.mubr.bf16.mxu0 0
        %441 = vmatmul.mubr.bf16.gmra.mrb[0].mxu0 %v376
        %v442 = vpop.f32.mrb[0].mxu0
        %v443 = vadd.f32 0.0, %v442
        %v444 = vpop.f32.mrb[0].mxu0
        %v445 = vpop.f32.mrb[0].mxu0
        %v446 = vadd.f32 0.0, %v445
        %v447 = vpop.f32.mrb[0].mxu0
        %448 = vmatprep.mubr.bf16.mxu0 0
        %449 = vmatmul.mubr.bf16.gmra.mrb[0].mxu0 %v379
        %v450 = vpop.f32.mrb[0].mxu0
        %v451 = vadd.f32 0.0, %v450
        %v452 = vpop.f32.mrb[0].mxu0
        %v453 = vpop.f32.mrb[0].mxu0
        %v454 = vadd.f32 0.0, %v453
        %v455 = vpop.f32.mrb[0].mxu0
        %456 = vmatprep.mubr.bf16.mxu0 0
        %457 = vmatmul.mubr.bf16.gmra.mrb[0].mxu0 %v382
        %v458 = vpop.f32.mrb[0].mxu0
        %v459 = vadd.f32 0.0, %v458
        %v460 = vpop.f32.mrb[0].mxu0
        %v461 = vpop.f32.mrb[0].mxu0
        %v462 = vadd.f32 0.0, %v461
        %v463 = vpop.f32.mrb[0].mxu0
        %464 = vmatprep.mubr.bf16.mxu0 0
        %465 = vmatmul.mubr.bf16.gmra.mrb[0].mxu0 %v385
        %v466 = vpop.f32.mrb[0].mxu0
        %v467 = vadd.f32 0.0, %v466
        %v468 = vpop.f32.mrb[0].mxu0
        %v469 = vpop.f32.mrb[0].mxu0
        %v470 = vadd.f32 0.0, %v469
        %v471 = vpop.f32.mrb[0].mxu0
        %472 = vmatprep.mubr.bf16.mxu0 0
        %473 = vmatmul.mubr.bf16.gmra.mrb[0].mxu0 %v388
        %v474 = vpop.f32.mrb[0].mxu0
        %v475 = vadd.f32 0.0, %v474
        %v476 = vpop.f32.mrb[0].mxu0
        %v477 = vpop.f32.mrb[0].mxu0
        %v478 = vadd.f32 0.0, %v477
        %v479 = vpop.f32.mrb[0].mxu0
        %480 = vmatprep.mubr.bf16.mxu0 0
        %481 = vmatmul.mubr.bf16.gmra.mrb[0].mxu0 %v391
        %v482 = vpop.f32.mrb[0].mxu0
        %v483 = vadd.f32 0.0, %v482
        %v484 = vpop.f32.mrb[0].mxu0
        %v485 = vpop.f32.mrb[0].mxu0
        %v486 = vadd.f32 0.0, %v485
        %v487 = vpop.f32.mrb[0].mxu0
        %488 = vmatprep.mubr.bf16.mxu0 0
        %489 = vmatmul.mubr.bf16.gmra.mrb[0].mxu0 %v394
        %v490 = vpop.f32.mrb[0].mxu0
        %v491 = vadd.f32 0.0, %v490
        %v492 = vpop.f32.mrb[0].mxu0
        %v493 = vpop.f32.mrb[0].mxu0
        %v494 = vadd.f32 0.0, %v493
        %v495 = vpop.f32.mrb[0].mxu0
        %496 = vdwg.mxu0
        %v497 = vadd.f32 %v337, %v435
        %v498 = vadd.f32 %v338, %v438
        %v499 = vadd.f32 %v339, %v443
        %v500 = vadd.f32 %v340, %v446
        %v501 = vadd.f32 %v341, %v451
        %v502 = vadd.f32 %v342, %v454
        %v503 = vadd.f32 %v343, %v459
        %v504 = vadd.f32 %v344, %v462
        %v505 = vadd.f32 %v345, %v467
        %v506 = vadd.f32 %v346, %v470
        %v507 = vadd.f32 %v347, %v475
        %v508 = vadd.f32 %v348, %v478
        %v509 = vadd.f32 %v349, %v483
        %v510 = vadd.f32 %v350, %v486
        %v511 = vadd.f32 %v351, %v491
        %v512 = vadd.f32 %v352, %v494
        %513 = vst [vmem:[#allocation2] sm:$0xff] %v497
        %514 = vst [vmem:[#allocation2 + $0x8] sm:$0xff] %v498
        %515 = vst [vmem:[#allocation2 + $0x10] sm:$0xff] %v499
        %516 = vst [vmem:[#allocation2 + $0x18] sm:$0xff] %v500
        %517 = vst [vmem:[#allocation2 + $0x20] sm:$0xff] %v501
        %518 = vst [vmem:[#allocation2 + $0x28] sm:$0xff] %v502
        %519 = vst [vmem:[#allocation2 + $0x30] sm:$0xff] %v503
        %520 = vst [vmem:[#allocation2 + $0x38] sm:$0xff] %v504
        %521 = vst [vmem:[#allocation2 + $0x40] sm:$0xff] %v505
        %522 = vst [vmem:[#allocation2 + $0x48] sm:$0xff] %v506
        %523 = vst [vmem:[#allocation2 + $0x50] sm:$0xff] %v507
        %524 = vst [vmem:[#allocation2 + $0x58] sm:$0xff] %v508
        %525 = vst [vmem:[#allocation2 + $0x60] sm:$0xff] %v509
        %526 = vst [vmem:[#allocation2 + $0x68] sm:$0xff] %v510
        %527 = vst [vmem:[#allocation2 + $0x70] sm:$0xff] %v511
        %528 = vst [vmem:[#allocation2 + $0x78] sm:$0xff] %v512
        %v529 = vld [vmem:[#allocation3] sm:$0x1]
        %v530 = vrot.slane %v335, 4
        %v531 = vadd.f32 %v335, %v530
        %v532 = vrot.slane %v531, 2
        %v533 = vadd.f32 %v531, %v532
        %v534 = vrot.slane %v533, 1
        %v535 = vadd.f32 %v533, %v534
        %v536 = vadd.f32 %v529, %v535
        %537 = vst [vmem:[#allocation3] sm:$0x1] %v536
        // Predicated region
        $region49: #{tpu_custom_call.1} parent=31 // pred_check
          %p538 = pneg %p308
        $region50: #{tpu_custom_call.1} parent=31 // pred_check_branch
          %540 = sbr.rel (%p538) target = $region52
        $region51: #{tpu_custom_call.1} parent=31 // pred_region
          %v541 = vld [vmem:[#allocation2] sm:$0xff]
          %v542 = vld [vmem:[#allocation2 + $0x8] sm:$0xff]
          %v543 = vld [vmem:[#allocation2 + $0x10] sm:$0xff]
          %v544 = vld [vmem:[#allocation2 + $0x18] sm:$0xff]
          %v545 = vld [vmem:[#allocation2 + $0x20] sm:$0xff]
          %v546 = vld [vmem:[#allocation2 + $0x28] sm:$0xff]
          %v547 = vld [vmem:[#allocation2 + $0x30] sm:$0xff]
          %v548 = vld [vmem:[#allocation2 + $0x38] sm:$0xff]
          %v549 = vld [vmem:[#allocation2 + $0x40] sm:$0xff]
          %v550 = vld [vmem:[#allocation2 + $0x48] sm:$0xff]
          %v551 = vld [vmem:[#allocation2 + $0x50] sm:$0xff]
          %v552 = vld [vmem:[#allocation2 + $0x58] sm:$0xff]
          %v553 = vld [vmem:[#allocation2 + $0x60] sm:$0xff]
          %v554 = vld [vmem:[#allocation2 + $0x68] sm:$0xff]
          %v555 = vld [vmem:[#allocation2 + $0x70] sm:$0xff]
          %v556 = vld [vmem:[#allocation2 + $0x78] sm:$0xff]
          %v557 = vld [vmem:[#allocation4] sm:$0xff]
          %v558 = vld [vmem:[#allocation4 + $0x8] sm:$0xff]
          %v559 = vld [vmem:[#allocation4 + $0x10] sm:$0xff]
          %v560 = vld [vmem:[#allocation4 + $0x18] sm:$0xff]
          %v561 = vld [vmem:[#allocation4 + $0x20] sm:$0xff]
          %v562 = vld [vmem:[#allocation4 + $0x28] sm:$0xff]
          %v563 = vld [vmem:[#allocation4 + $0x30] sm:$0xff]
          %v564 = vld [vmem:[#allocation4 + $0x38] sm:$0xff]
          %v565 = vld [vmem:[#allocation4 + $0x40] sm:$0xff]
          %v566 = vld [vmem:[#allocation4 + $0x48] sm:$0xff]
          %v567 = vld [vmem:[#allocation4 + $0x50] sm:$0xff]
          %v568 = vld [vmem:[#allocation4 + $0x58] sm:$0xff]
          %v569 = vld [vmem:[#allocation4 + $0x60] sm:$0xff]
          %v570 = vld [vmem:[#allocation4 + $0x68] sm:$0xff]
          %v571 = vld [vmem:[#allocation4 + $0x70] sm:$0xff]
          %v572 = vld [vmem:[#allocation4 + $0x78] sm:$0xff]
          %v573 = vmul.f32 %v541, %v557
          %v574 = vmul.f32 %v542, %v558
          %v575 = vmul.f32 %v543, %v559
          %v576 = vmul.f32 %v544, %v560
          %v577 = vmul.f32 %v545, %v561
          %v578 = vmul.f32 %v546, %v562
          %v579 = vmul.f32 %v547, %v563
          %v580 = vmul.f32 %v548, %v564
          %v581 = vmul.f32 %v549, %v565
          %v582 = vmul.f32 %v550, %v566
          %v583 = vmul.f32 %v551, %v567
          %v584 = vmul.f32 %v552, %v568
          %v585 = vmul.f32 %v553, %v569
          %v586 = vmul.f32 %v554, %v570
          %v587 = vmul.f32 %v555, %v571
          %v588 = vmul.f32 %v556, %v572
          %589 = vst [vmem:[%s300] sm:$0xff] %v573
          %590 = vst [vmem:[%s300 + $0x8] sm:$0xff] %v574
          %591 = vst [vmem:[%s300 + $0x10] sm:$0xff] %v575
          %592 = vst [vmem:[%s300 + $0x18] sm:$0xff] %v576
          %593 = vst [vmem:[%s300 + $0x20] sm:$0xff] %v577
          %594 = vst [vmem:[%s300 + $0x28] sm:$0xff] %v578
          %595 = vst [vmem:[%s300 + $0x30] sm:$0xff] %v579
          %596 = vst [vmem:[%s300 + $0x38] sm:$0xff] %v580
          %597 = vst [vmem:[%s300 + $0x40] sm:$0xff] %v581
          %598 = vst [vmem:[%s300 + $0x48] sm:$0xff] %v582
          %599 = vst [vmem:[%s300 + $0x50] sm:$0xff] %v583
          %600 = vst [vmem:[%s300 + $0x58] sm:$0xff] %v584
          %601 = vst [vmem:[%s300 + $0x60] sm:$0xff] %v585
          %602 = vst [vmem:[%s300 + $0x68] sm:$0xff] %v586
          %603 = vst [vmem:[%s300 + $0x70] sm:$0xff] %v587
          %604 = vst [vmem:[%s300 + $0x78] sm:$0xff] %v588
          %v605 = vld [vmem:[#allocation3] sm:$0x1]
          %606 = vst [vmem:[%s306] sm:$0x1] %v605
        $region52: #{tpu_custom_call.1} parent=31 // pred_fallthru
          _
        %s607 = sand.u32 %s136, 1
        %s608 = scalar_lea.sflag [#allocation6], %s607
        %s609 = sand.u32 %s136, 1
        %s610 = smul.addr %s609, 128
        %s611 = scalar_lea.vmem [#allocation10], %s610
        %s612 = sand.u32 %s164, 1
        %s613 = scalar_lea.sflag [#allocation12], %s612
        %s614 = sand.u32 %s164, 1
        %s615 = scalar_lea.vmem [#allocation11], %s614
        // Predicated region
        $region53: #{tpu_custom_call.1} parent=31 // pred_check
          %p616 = pneg %p146
        $region54: #{tpu_custom_call.1} parent=31 // pred_check_branch
          %618 = sbr.rel (%p616) target = $region56
        $region55: #{tpu_custom_call.1} parent=31 // pred_region
          %s620 = ssub.s32 2048, 2048
          %621 = vsyncadd %s608, %s620
          %s622 = smul.addr %s32, 16
          %s623 = smul.addr %s31, 16
          %s624 = sadd.s32 %s622, %s623
          %s625 = smul.addr %s624, 128
          %s626 = scalar_lea.hbm %s3, %s625
          %s627 = sshll.u32 %s611, 4
          %s628 = int_to_ptr.vmem [resolvable:$true] %s627
          %633 = dma.vmem_to_hbm [thread:$0]  %s628, 2048, %s626, %s608, 128, 128, 8
        $region56: #{tpu_custom_call.1} parent=31 // pred_fallthru
          _
        // Predicated region
        $region57: #{tpu_custom_call.1} parent=31 // pred_check
          %p634 = pneg %p174
        $region58: #{tpu_custom_call.1} parent=31 // pred_check_branch
          %636 = sbr.rel (%p634) target = $region60
        $region59: #{tpu_custom_call.1} parent=31 // pred_region
          %s638 = ssub.s32 16, 16
          %639 = vsyncadd %s613, %s638
          %s640 = sadd.s32 %s32, %s31
          %s641 = smul.addr %s640, 16
          %s642 = scalar_lea.hbm %s4, %s641
          %s644 = sshll.u32 %s615, 4
          %s645 = int_to_ptr.vmem [resolvable:$true] %s644
          %647 = dma.vmem_to_hbm [thread:$0]  %s645, 16, %s642, %s613
        $region60: #{tpu_custom_call.1} parent=31 // pred_fallthru
          _
      $region32: #{tpu_custom_call.1} parent=5 // pred_fallthru
        _
      %p648 = scmp.le.s32.totalorder 2, %s21
      // Predicated region
      $region61: #{tpu_custom_call.1} parent=5 // pred_check
        %p649 = pneg %p648
      $region62: #{tpu_custom_call.1} parent=5 // pred_check_branch
        %651 = sbr.rel (%p649) target = $region64
      $region63: #{tpu_custom_call.1} parent=5 // pred_region
        %s652 = ssub.s32 %s21, 2
        // Predicated region
        $region65: #{tpu_custom_call.1} parent=63 // pred_check
          %p653 = pneg %p152
        $region66: #{tpu_custom_call.1} parent=63 // pred_check_branch
          %655 = sbr.rel (%p653) target = $region68
        $region67: #{tpu_custom_call.1} parent=63 // pred_region
          %s656 = sand.u32 %s137, 1
          %s657 = scalar_lea.sflag [#allocation6], %s656
          %s658 = sand.u32 %s137, 1
          %s659 = smul.addr %s658, 128
          %s660 = scalar_lea.vmem [#allocation10], %s659
          %661 = dma.done %s657, 2048
        $region68: #{tpu_custom_call.1} parent=63 // pred_fallthru
          _
        // Predicated region
        $region69: #{tpu_custom_call.1} parent=63 // pred_check
          %p662 = pneg %p180
        $region70: #{tpu_custom_call.1} parent=63 // pred_check_branch
          %664 = sbr.rel (%p662) target = $region72
        $region71: #{tpu_custom_call.1} parent=63 // pred_region
          %s665 = sand.u32 %s165, 1
          %s666 = scalar_lea.sflag [#allocation12], %s665
          %s667 = sand.u32 %s165, 1
          %s668 = scalar_lea.vmem [#allocation11], %s667
          %669 = dma.done %s666, 16
        $region72: #{tpu_custom_call.1} parent=63 // pred_fallthru
          _
      $region64: #{tpu_custom_call.1} parent=5 // pred_fallthru
        _
    $region6: #{tpu_custom_call.1} parent=1 // loop_footer
      %s25 = sadd.s32 1, %s21
    $region7: #{tpu_custom_call.1} parent=1 // loop_footer_branch
      %20 = sbr.rel target = $region3
    $region8: #{tpu_custom_call.1} parent=1 // loop_exit
      _
    %670 = vsyncpa [#allocation5], 1
    %s671 = scalar_lea.sflag [#allocation5], 1
    %672 = vsyncpa %s671, 1
    %673 = vsyncpa [#allocation8], 1
    %s674 = scalar_lea.sflag [#allocation8], 1
    %675 = vsyncpa %s674, 1
    %676 = vsyncpa [#allocation6], 1
    %s677 = scalar_lea.sflag [#allocation6], 1
    %678 = vsyncpa %s677, 1
    %679 = vsyncpa [#allocation12], 1
    %s680 = scalar_lea.sflag [#allocation12], 1
    %681 = vsyncpa %s680, 1

</llo_original>
